<compile_context>
chip_gen: v5e
topology: v5e:2x2
jax: 0.10.0
libtpu: 0.0.40
codegen_flags: <defaults>
</compile_context>

<pallas_src>
import functools

import numpy as np
import jax
import jax.numpy as jnp
from jax.experimental import pallas as pl
from jax.experimental.pallas import tpu as pltpu


def _mgpooling_kernel(x_ref, p_ref, lmask_ref, wa_ref, wm_ref, w2_ref, o_ref,
                      *, inv_area, half):
    # x block: (Bt, C, H*W) with the whole flattened spatial extent on lanes.
    Bt, C, HW = x_ref.shape
    x = x_ref[...]                                    # native dtype, no f32 copy

    # ---- Average pools: ONE MXU matmul against the (HW, 4) 0/1 indicator.
    # Scaling by 1/(h2*w2) happens on the tiny f32 accumulator output.
    x2 = x.reshape(Bt * C, HW)
    avgs = jnp.dot(x2, p_ref[...], preferred_element_type=jnp.float32)
    avgs = avgs * jnp.float32(inv_area)               # (Bt*C, 4) f32
    avgs3 = avgs.reshape(Bt, C, 4)
    # Quadrant features in block order [TL | TR | BL | BR].  The global
    # average is NOT materialised: avg1 = 0.25 * sum of quadrant averages is
    # linear, so its weight column was folded into wa wrapper-side.
    A = jnp.concatenate(
        [avgs3[:, :, 0], avgs3[:, :, 1], avgs3[:, :, 2], avgs3[:, :, 3]],
        axis=1)                                        # (Bt, 4C) f32

    # ---- Max pools: 2 full-tile selects + lane slices at HW/2 (the top half
    # of the image is exactly the first HW/2 flat positions).
    if jnp.issubdtype(x.dtype, jnp.floating):
        minv = jnp.asarray(jnp.finfo(x.dtype).min, x.dtype)
    else:
        minv = jnp.asarray(jnp.iinfo(x.dtype).min, x.dtype)
    left = lmask_ref[...] > 0.5                        # (1, 1, HW) bool
    xl = jnp.where(left, x, minv)                      # keep left columns
    xr = jnp.where(left, minv, x)                      # keep right columns
    m00 = jnp.max(xl[:, :, :half], axis=-1)            # top-left
    m01 = jnp.max(xr[:, :, :half], axis=-1)            # top-right
    m10 = jnp.max(xl[:, :, half:], axis=-1)            # bottom-left
    m11 = jnp.max(xr[:, :, half:], axis=-1)            # bottom-right
    gmax = jnp.maximum(jnp.maximum(m00, m01), jnp.maximum(m10, m11))
    M = jnp.concatenate([m00, m01, m10, m11, gmax],
                        axis=1).astype(jnp.float32)    # (Bt, 5C) f32
    # TODO(synk): if a bundle dump shows vld slot saturation on v7x, fuse the
    # MXU push / max accumulation / rescale into one unrolled lane-chunk loop
    # so each x vreg is loaded once.

    # ---- FC path (weights pre-permuted / folded wrapper-side), all f32.
    h = (jnp.dot(A, wa_ref[...], preferred_element_type=jnp.float32)
         + jnp.dot(M, wm_ref[...], preferred_element_type=jnp.float32))
    h = jnp.maximum(h, 0.0)                            # ReLU
    s = jnp.dot(h, w2_ref[...], preferred_element_type=jnp.float32)
    s = 1.0 / (1.0 + jnp.exp(-s))                      # Sigmoid, (Bt, C) f32

    # Channel-wise rescale; multiply in f32 via promotion, single downcast,
    # lane-dense (Bt, C, HW) store.
    o_ref[...] = (x * s[:, :, None]).astype(o_ref.dtype)


def _vmem_capacity_and_cores():
    """Best-effort (VMEM capacity, TensorCore count) for tile-policy decisions."""
    cap = 64 * 1024 * 1024                     # conservative default (v7x-sized)
    try:
        info = pltpu.get_tpu_info()
        cap = int(getattr(info, "vmem_capacity_bytes", cap) or cap)
    except Exception:
        pass
    kind = ""
    try:
        kind = str(jax.devices()[0].device_kind).lower()
    except Exception:
        pass
    if ("v2" in kind or "v3" in kind or "v4" in kind
            or "v5" in kind or "v6" in kind):
        cores = 1                              # single TC: grid is a serial loop
    elif "7" in kind:
        cores = 2                              # v7x: two TCs share the chip
    else:
        cores = 1
    return cap, cores


def _padded_block_bytes(shape, itemsize):
    """VMEM footprint of ONE buffer of a block ((8/16/32, 128) tile padding)."""
    shape = tuple(int(d) for d in shape)
    if len(shape) == 1:
        shape = (1,) + shape
    sub = 8 if itemsize >= 4 else (16 if itemsize == 2 else 32)
    lead = 1
    for d in shape[:-2]:
        lead *= d
    rows = -(-shape[-2] // sub) * sub
    cols = -(-shape[-1] // 128) * 128
    return lead * rows * cols * itemsize


def _pick_batch_tile(b, per_sample_bytes, vmem_limit, resident_bytes, num_cores):
    # Budget for the big (bt, C, HW) blocks: double-buffered input + output,
    # minus the resident (double-buffered) weight/pool/mask blocks.
    budget = int(vmem_limit * 0.9) - int(resident_bytes)
    max_bt = max(1, budget // (4 * per_sample_bytes))
    max_bt = min(max_bt, b)
    # TODO(synk): if even a single-sample block does not fit (very large C*HW
    # on v7x's 64 MiB VMEM) a C-tiled two-pass variant (pool+FC producing s,
    # then a separate rescale kernel) would be needed; we fall back to bt=1
    # and rely on the raised vmem limit.

    divisors = [d for d in range(1, b + 1) if b % d == 0]
    fitting = [d for d in divisors if d <= max_bt] or [1]
    if num_cores > 1 and b > 1:
        # v7x: prefer an even number of grid steps so both TensorCores get
        # equal work; otherwise at least >1 step; otherwise the best fit.
        even_steps = [d for d in fitting if (b // d) % num_cores == 0]
        multi_step = [d for d in fitting if (b // d) > 1]
        pool = even_steps or multi_step or fitting
    else:
        # Single TensorCore (v5e/v6e): fewest, biggest grid steps -> largest
        # DMAs, minimal per-step overhead.
        pool = fitting
    return max(pool)


def mgpooling(x, w1_torch, w2_torch):
    """x: (b, c, H, W); w1_torch: (hidden, 10c); w2_torch: (c, hidden)."""
    b, c, H, W = x.shape
    hidden = w1_torch.shape[0]
    assert H % 2 == 0 and W % 2 == 0, (
        "2x2 adaptive pooling is implemented as equal quadrants (even H, W)")
    hw = H * W
    h_half, w_half = H // 2, W // 2
    # TODO(synk): for feature maps where H*W is not a multiple of 128 (e.g.
    # 14x14 or 8x8 late-ResNet stages) a C-on-lanes layout would avoid lane
    # padding / masked stores; this version keeps H*W on the lane axis.

    # ---- Weight preprocessing (f32, once, outside the kernel).
    # PyTorch feature order: [avg1(c) | avg2(4c, idx 4j+q) | max1(c) | max2(4c)].
    w1 = np.asarray(w1_torch, np.float32)              # (hidden, 10c)
    w_avg1 = w1[:, 0 * c:1 * c]
    w_avg2 = w1[:, 1 * c:5 * c]
    w_max1 = w1[:, 5 * c:6 * c]
    w_max2 = w1[:, 6 * c:10 * c]
    # Fold the global-average weight into the quadrant weights
    # (avg1 == 0.25 * (a_TL + a_TR + a_BL + a_BR)).
    wa = np.concatenate(
        [w_avg2[:, q::4] + 0.25 * w_avg1 for q in range(4)], axis=1)  # (hidden, 4c)
    # Max weights in the kernel's block order [m_TL | m_TR | m_BL | m_BR | max1].
    wm = np.concatenate(
        [w_max2[:, q::4] for q in range(4)] + [w_max1], axis=1)       # (hidden, 5c)
    wa_k = jnp.asarray(wa.T)                                          # (4c, hidden)
    wm_k = jnp.asarray(wm.T)                                          # (5c, hidden)
    w2_k = jnp.asarray(np.asarray(w2_torch, np.float32).T)            # (hidden, c)

    # ---- Exact 0/1 quadrant indicator (HW, 4), columns [TL, TR, BL, BR], and
    # a (1, 1, HW) left-column indicator (precomputed: no per-step iota/div/mod).
    pos = np.arange(hw)
    hh, ww = pos // W, pos % W
    top, left = hh < h_half, ww < w_half
    pool_ind = np.stack([top & left, top & ~left, ~top & left, ~top & ~left],
                        axis=1).astype(np.float32)
    pool_ind = jnp.asarray(pool_ind, dtype=x.dtype)        # 0/1 exact in any float
    left_mask = jnp.asarray(left.astype(np.float32).reshape(1, 1, hw))

    # ---- Lane-dense layout: whole spatial extent on the 128-wide lane axis.
    x_flat = x.reshape(b, c, hw)

    # ---- Generation-aware batch tiling.
    vmem_cap, num_cores = _vmem_capacity_and_cores()
    vmem_limit = (vmem_cap // 4) * 3                   # ~25% headroom for Mosaic
    itemsize = x.dtype.itemsize
    per_sample = _padded_block_bytes((1, c, hw), itemsize)
    resident = 2 * (_padded_block_bytes(pool_ind.shape, itemsize)
                    + _padded_block_bytes(left_mask.shape, 4)
                    + _padded_block_bytes(wa_k.shape, 4)
                    + _padded_block_bytes(wm_k.shape, 4)
                    + _padded_block_bytes(w2_k.shape, 4))
    bt = _pick_batch_tile(b, per_sample, vmem_limit, resident, num_cores)

    kernel = functools.partial(_mgpooling_kernel,
                               inv_area=1.0 / float(h_half * w_half),
                               half=hw // 2)

    out_flat = pl.pallas_call(
        kernel,
        out_shape=jax.ShapeDtypeStruct((b, c, hw), x.dtype),
        grid_spec=pltpu.PrefetchScalarGridSpec(
            num_scalar_prefetch=0,
            grid=(b // bt,),
            in_specs=[
                pl.BlockSpec((bt, c, hw), lambda i: (i, 0, 0)),      # x
                pl.BlockSpec((hw, 4), lambda i: (0, 0)),             # pool 0/1
                pl.BlockSpec((1, 1, hw), lambda i: (0, 0, 0)),       # left mask
                pl.BlockSpec((4 * c, hidden), lambda i: (0, 0)),     # wa
                pl.BlockSpec((5 * c, hidden), lambda i: (0, 0)),     # wm
                pl.BlockSpec((hidden, c), lambda i: (0, 0)),         # w2
            ],
            out_specs=pl.BlockSpec((bt, c, hw), lambda i: (i, 0, 0)),
        ),
        compiler_params=pltpu.CompilerParams(
            dimension_semantics=("parallel",),
            vmem_limit_bytes=vmem_limit,
        ),
    )(x_flat, pool_ind, left_mask, wa_k, wm_k, w2_k)

    return out_flat.reshape(b, c, H, W)


def mgpooling_reference(x, w1_torch, w2_torch):
    """Pure-JAX mirror of the PyTorch forward (for verification)."""
    b, c, H, W = x.shape
    xr = x.reshape(b, c, 2, H // 2, 2, W // 2)
    avg1 = jnp.mean(x, axis=(2, 3))                              # (b, c)
    avg2 = jnp.mean(xr, axis=(3, 5)).reshape(b, 4 * c)           # (b, 4c)
    max1 = jnp.max(x, axis=(2, 3))                               # (b, c)
    max2 = jnp.max(xr, axis=(3, 5)).reshape(b, 4 * c)            # (b, 4c)
    y = jnp.concatenate([avg1, avg2, max1, max2], axis=1)        # (b, 10c)
    h = jnp.maximum(y @ jnp.asarray(w1_torch).T, 0.0)
    s = jax.nn.sigmoid(h @ jnp.asarray(w2_torch).T)
    return x * s[:, :, None, None]


if __name__ == "__main__":
    # Small shapes consistent with the module: reduction=16 requires c >= 16.
    b, c, H, W = 2, 32, 16, 16
    reduction = 16
    hidden = c // reduction  # = 2

    key = jax.random.PRNGKey(0)
    kx, k1, k2 = jax.random.split(key, 3)
    x = jax.random.normal(kx, (b, c, H, W), dtype=jnp.float32)
    # nn.Linear weights, PyTorch convention: (out_features, in_features), no bias.
    w1 = jax.random.normal(k1, (hidden, 10 * c), dtype=jnp.float32) * 0.05
    w2 = jax.random.normal(k2, (c, hidden), dtype=jnp.float32) * 0.05

    out = mgpooling(x, w1, w2)
    out = jax.block_until_ready(out)

    ref = jax.block_until_ready(mgpooling_reference(x, w1, w2))
    assert out.shape == (b, c, H, W)
    np.testing.assert_allclose(np.asarray(out), np.asarray(ref), rtol=1e-5, atol=1e-5)

    print("KERNEL_OK")
</pallas_src>

<mosaic_0001>
module attributes {stable_mosaic.version = 11 : i64} {
  func.func @_mgpooling_kernel(%arg0: i32, %arg1: memref<2x32x256xf32, #tpu.memory_space<vmem>>, %arg2: memref<256x4xf32, #tpu.memory_space<vmem>>, %arg3: memref<1x1x256xf32, #tpu.memory_space<vmem>>, %arg4: memref<128x2xf32, #tpu.memory_space<vmem>>, %arg5: memref<160x2xf32, #tpu.memory_space<vmem>>, %arg6: memref<2x32xf32, #tpu.memory_space<vmem>>, %arg7: memref<2x32x256xf32, #tpu.memory_space<vmem>>) attributes {dimension_semantics = [#tpu.dimension_semantics<parallel>], iteration_bounds = array<i64: 1>, scalar_prefetch = 0 : i64, scratch_operands = 0 : i64, tpu.core_type = #tpu.core_type<tc>, window_params = [{transform_indices = @transform_0, window_bounds = array<i64: 2, 32, 256>}, {pipeline_mode = #tpu.pipeline_mode<synchronous>, transform_indices = @transform_1, window_bounds = array<i64: 256, 4>}, {pipeline_mode = #tpu.pipeline_mode<synchronous>, transform_indices = @transform_2, window_bounds = array<i64: 1, 1, 256>}, {pipeline_mode = #tpu.pipeline_mode<synchronous>, transform_indices = @transform_3, window_bounds = array<i64: 128, 2>}, {pipeline_mode = #tpu.pipeline_mode<synchronous>, transform_indices = @transform_4, window_bounds = array<i64: 160, 2>}, {pipeline_mode = #tpu.pipeline_mode<synchronous>, transform_indices = @transform_5, window_bounds = array<i64: 2, 32>}, {transform_indices = @transform_6, window_bounds = array<i64: 2, 32, 256>}]} {
    %c0 = arith.constant 0 : index
    %c0_0 = arith.constant 0 : index
    %c0_1 = arith.constant 0 : index
    %0 = vector.load %arg1[%c0, %c0_0, %c0_1] : memref<2x32x256xf32, #tpu.memory_space<vmem>>, vector<2x32x256xf32>
    %1 = vector.shape_cast %0 : vector<2x32x256xf32> to vector<64x256xf32>
    %c0_2 = arith.constant 0 : index
    %c0_3 = arith.constant 0 : index
    %2 = vector.load %arg2[%c0_2, %c0_3] : memref<256x4xf32, #tpu.memory_space<vmem>>, vector<256x4xf32>
    %cst = arith.constant dense<0.000000e+00> : vector<64x4xf32>
    %3 = tpu.matmul %1, %2, %cst {dimension_numbers = #tpu.dot_dimension_numbers<[1], [0], [0], [1], [0, 0, 1, 1], [], []>} : vector<64x256xf32>, vector<256x4xf32>, vector<64x4xf32> -> vector<64x4xf32>
    %cst_4 = arith.constant 1.562500e-02 : f32
    %4 = vector.broadcast %cst_4 : f32 to vector<64x4xf32>
    %5 = arith.mulf %3, %4 : vector<64x4xf32>
    %6 = vector.shape_cast %5 : vector<64x4xf32> to vector<2x32x4xf32>
    %7 = vector.extract_strided_slice %6 {offsets = [0, 0, 0], sizes = [2, 32, 1], strides = [1, 1, 1]} : vector<2x32x4xf32> to vector<2x32x1xf32>
    %8 = vector.shape_cast %7 : vector<2x32x1xf32> to vector<2x32xf32>
    %9 = vector.extract_strided_slice %6 {offsets = [0, 0, 1], sizes = [2, 32, 1], strides = [1, 1, 1]} : vector<2x32x4xf32> to vector<2x32x1xf32>
    %10 = vector.shape_cast %9 : vector<2x32x1xf32> to vector<2x32xf32>
    %11 = vector.extract_strided_slice %6 {offsets = [0, 0, 2], sizes = [2, 32, 1], strides = [1, 1, 1]} : vector<2x32x4xf32> to vector<2x32x1xf32>
    %12 = vector.shape_cast %11 : vector<2x32x1xf32> to vector<2x32xf32>
    %13 = vector.extract_strided_slice %6 {offsets = [0, 0, 3], sizes = [2, 32, 1], strides = [1, 1, 1]} : vector<2x32x4xf32> to vector<2x32x1xf32>
    %14 = vector.shape_cast %13 : vector<2x32x1xf32> to vector<2x32xf32>
    %15 = tpu.concatenate %8, %10, %12, %14 in 1 : vector<2x32xf32>, vector<2x32xf32>, vector<2x32xf32>, vector<2x32xf32> -> vector<2x128xf32>
    %c0_5 = arith.constant 0 : index
    %c0_6 = arith.constant 0 : index
    %c0_7 = arith.constant 0 : index
    %16 = vector.load %arg3[%c0_5, %c0_6, %c0_7] : memref<1x1x256xf32, #tpu.memory_space<vmem>>, vector<1x1x256xf32>
    %cst_8 = arith.constant 5.000000e-01 : f32
    %17 = vector.broadcast %cst_8 : f32 to vector<1x1x256xf32>
    %18 = arith.cmpf ogt, %16, %17 : vector<1x1x256xf32>
    %cst_9 = arith.constant -3.40282347E+38 : f32
    %19 = vector.shape_cast %18 : vector<1x1x256xi1> to vector<1x1x256xi1>
    %20 = vector.broadcast %19 : vector<1x1x256xi1> to vector<2x32x256xi1>
    %21 = vector.broadcast %cst_9 : f32 to vector<2x32x256xf32>
    %22 = arith.select %20, %0, %21 : vector<2x32x256xi1>, vector<2x32x256xf32>
    %cst_10 = arith.constant -3.40282347E+38 : f32
    %23 = vector.shape_cast %18 : vector<1x1x256xi1> to vector<1x1x256xi1>
    %24 = vector.broadcast %23 : vector<1x1x256xi1> to vector<2x32x256xi1>
    %25 = vector.broadcast %cst_10 : f32 to vector<2x32x256xf32>
    %26 = arith.select %24, %25, %0 : vector<2x32x256xi1>, vector<2x32x256xf32>
    %27 = vector.extract_strided_slice %22 {offsets = [0, 0, 0], sizes = [2, 32, 128], strides = [1, 1, 1]} : vector<2x32x256xf32> to vector<2x32x128xf32>
    %cst_11 = arith.constant dense<0xFF800000> : vector<2x32xf32>
    %28 = vector.multi_reduction <maximumf>, %27, %cst_11 [2] : vector<2x32x128xf32> to vector<2x32xf32>
    %29 = vector.extract_strided_slice %26 {offsets = [0, 0, 0], sizes = [2, 32, 128], strides = [1, 1, 1]} : vector<2x32x256xf32> to vector<2x32x128xf32>
    %cst_12 = arith.constant dense<0xFF800000> : vector<2x32xf32>
    %30 = vector.multi_reduction <maximumf>, %29, %cst_12 [2] : vector<2x32x128xf32> to vector<2x32xf32>
    %31 = vector.extract_strided_slice %22 {offsets = [0, 0, 128], sizes = [2, 32, 128], strides = [1, 1, 1]} : vector<2x32x256xf32> to vector<2x32x128xf32>
    %cst_13 = arith.constant dense<0xFF800000> : vector<2x32xf32>
    %32 = vector.multi_reduction <maximumf>, %31, %cst_13 [2] : vector<2x32x128xf32> to vector<2x32xf32>
    %33 = vector.extract_strided_slice %26 {offsets = [0, 0, 128], sizes = [2, 32, 128], strides = [1, 1, 1]} : vector<2x32x256xf32> to vector<2x32x128xf32>
    %cst_14 = arith.constant dense<0xFF800000> : vector<2x32xf32>
    %34 = vector.multi_reduction <maximumf>, %33, %cst_14 [2] : vector<2x32x128xf32> to vector<2x32xf32>
    %35 = arith.maximumf %28, %30 : vector<2x32xf32>
    %36 = arith.maximumf %32, %34 : vector<2x32xf32>
    %37 = arith.maximumf %35, %36 : vector<2x32xf32>
    %38 = tpu.concatenate %28, %30, %32, %34, %37 in 1 : vector<2x32xf32>, vector<2x32xf32>, vector<2x32xf32>, vector<2x32xf32>, vector<2x32xf32> -> vector<2x160xf32>
    %c0_15 = arith.constant 0 : index
    %c0_16 = arith.constant 0 : index
    %39 = vector.load %arg4[%c0_15, %c0_16] : memref<128x2xf32, #tpu.memory_space<vmem>>, vector<128x2xf32>
    %cst_17 = arith.constant dense<0.000000e+00> : vector<2x2xf32>
    %40 = tpu.matmul %15, %39, %cst_17 {dimension_numbers = #tpu.dot_dimension_numbers<[1], [0], [0], [1], [0, 0, 1, 1], [], []>} : vector<2x128xf32>, vector<128x2xf32>, vector<2x2xf32> -> vector<2x2xf32>
    %c0_18 = arith.constant 0 : index
    %c0_19 = arith.constant 0 : index
    %41 = vector.load %arg5[%c0_18, %c0_19] : memref<160x2xf32, #tpu.memory_space<vmem>>, vector<160x2xf32>
    %cst_20 = arith.constant dense<0.000000e+00> : vector<2x2xf32>
    %42 = tpu.matmul %38, %41, %cst_20 {dimension_numbers = #tpu.dot_dimension_numbers<[1], [0], [0], [1], [0, 0, 1, 1], [], []>} : vector<2x160xf32>, vector<160x2xf32>, vector<2x2xf32> -> vector<2x2xf32>
    %43 = arith.addf %40, %42 : vector<2x2xf32>
    %cst_21 = arith.constant 0.000000e+00 : f32
    %44 = vector.broadcast %cst_21 : f32 to vector<2x2xf32>
    %45 = arith.maximumf %43, %44 : vector<2x2xf32>
    %c0_22 = arith.constant 0 : index
    %c0_23 = arith.constant 0 : index
    %46 = vector.load %arg6[%c0_22, %c0_23] : memref<2x32xf32, #tpu.memory_space<vmem>>, vector<2x32xf32>
    %cst_24 = arith.constant dense<0.000000e+00> : vector<2x32xf32>
    %47 = tpu.matmul %45, %46, %cst_24 {dimension_numbers = #tpu.dot_dimension_numbers<[1], [0], [0], [1], [0, 0, 1, 1], [], []>} : vector<2x2xf32>, vector<2x32xf32>, vector<2x32xf32> -> vector<2x32xf32>
    %cst_25 = arith.constant 0.000000e+00 : f32
    %48 = vector.broadcast %cst_25 : f32 to vector<2x32xf32>
    %49 = arith.subf %48, %47 : vector<2x32xf32>
    %50 = math.exp %49 : vector<2x32xf32>
    %cst_26 = arith.constant 1.000000e+00 : f32
    %51 = vector.broadcast %cst_26 : f32 to vector<2x32xf32>
    %52 = arith.addf %51, %50 : vector<2x32xf32>
    %cst_27 = arith.constant 1.000000e+00 : f32
    %53 = vector.broadcast %cst_27 : f32 to vector<2x32xf32>
    %54 = arith.divf %53, %52 : vector<2x32xf32>
    %55 = vector.shape_cast %54 : vector<2x32xf32> to vector<2x32x1xf32>
    %56 = vector.broadcast %55 : vector<2x32x1xf32> to vector<2x32x256xf32>
    %57 = arith.mulf %0, %56 : vector<2x32x256xf32>
    %c0_28 = arith.constant 0 : index
    %c0_29 = arith.constant 0 : index
    %c0_30 = arith.constant 0 : index
    %58 = vector.load %arg7[%c0_28, %c0_29, %c0_30] : memref<2x32x256xf32, #tpu.memory_space<vmem>>, vector<2x32x256xf32>
    tpu.vector_store %arg7[%c0_28, %c0_29, %c0_30], %57 {strides = array<i32>} : memref<2x32x256xf32, #tpu.memory_space<vmem>>, vector<2x32x256xf32>,
    return
  }
  func.func @transform_0(%arg0: i32) -> (i32, i32, i32) {
    %c0_i32 = arith.constant 0 : i32
    %c0_i32_0 = arith.constant 0 : i32
    %c0_i32_1 = arith.constant 0 : i32
    return %arg0, %c0_i32, %c0_i32_0 : i32, i32, i32
  }
  func.func @transform_1(%arg0: i32) -> (i32, i32) {
    %c0_i32 = arith.constant 0 : i32
    %c0_i32_0 = arith.constant 0 : i32
    %c0_i32_1 = arith.constant 0 : i32
    return %c0_i32, %c0_i32_0 : i32, i32
  }
  func.func @transform_2(%arg0: i32) -> (i32, i32, i32) {
    %c0_i32 = arith.constant 0 : i32
    %c0_i32_0 = arith.constant 0 : i32
    %c0_i32_1 = arith.constant 0 : i32
    %c0_i32_2 = arith.constant 0 : i32
    return %c0_i32, %c0_i32_0, %c0_i32_1 : i32, i32, i32
  }
  func.func @transform_3(%arg0: i32) -> (i32, i32) {
    %c0_i32 = arith.constant 0 : i32
    %c0_i32_0 = arith.constant 0 : i32
    %c0_i32_1 = arith.constant 0 : i32
    return %c0_i32, %c0_i32_0 : i32, i32
  }
  func.func @transform_4(%arg0: i32) -> (i32, i32) {
    %c0_i32 = arith.constant 0 : i32
    %c0_i32_0 = arith.constant 0 : i32
    %c0_i32_1 = arith.constant 0 : i32
    return %c0_i32, %c0_i32_0 : i32, i32
  }
  func.func @transform_5(%arg0: i32) -> (i32, i32) {
    %c0_i32 = arith.constant 0 : i32
    %c0_i32_0 = arith.constant 0 : i32
    %c0_i32_1 = arith.constant 0 : i32
    return %c0_i32, %c0_i32_0 : i32, i32
  }
  func.func @transform_6(%arg0: i32) -> (i32, i32, i32) {
    %c0_i32 = arith.constant 0 : i32
    %c0_i32_0 = arith.constant 0 : i32
    %c0_i32_1 = arith.constant 0 : i32
    return %arg0, %c0_i32, %c0_i32_0 : i32, i32, i32
  }
}

</mosaic_0001>

<llo_original>
// kernel: tpu_custom_call.1
$region0: #{tpu_custom_call.1}
  #allocation0 [shape = 'u32[]', space=smem, size = 0x4, offset = 0x4, fixed_abs, tag = 'smem constant byte address 0x4 - core index']
  #allocation1 [shape = 'u32[72,128]{1,0:T(1,128)}', space=vmem, size = 0x9000, scoped, tag = 'internal scratch']
  %s0 = inlined_call_operand.vmem [shape: f32[2,32,256], index: 0, kind: input, shape index: {}]
  %s1 = inlined_call_operand.vmem [shape: f32[256,4], index: 1, kind: input, shape index: {}]
  %s2 = inlined_call_operand.vmem [shape: f32[1,1,256], index: 2, kind: input, shape index: {}]
  %s3 = inlined_call_operand.vmem [shape: f32[128,2], index: 3, kind: input, shape index: {}]
  %s4 = inlined_call_operand.vmem [shape: f32[160,2], index: 4, kind: input, shape index: {}]
  %s5 = inlined_call_operand.vmem [shape: f32[2,32], index: 5, kind: input, shape index: {}]
  %s6 = inlined_call_operand.hbm [shape: f32[2,32,256], index: 6, kind: output, shape index: {}]
  %s7 = sld [smem:[#allocation0]]
  $region34: #{tpu_custom_call.1} parent=0
    _
  %s9 = ssub.s32 1, %s7
  %s10 = scalar_select 0, %s9, %s7
  $region1: #{tpu_custom_call.1} parent=0
    #allocation2 [shape = 'u8[65536]{0}', space=vmem, size = 0x10000, scoped, tag = 'output window, operand 0, single buffered']
    #allocation3 [shape = 's32[1]{0}', space=sflag, size = 0x4, scoped, tag = 'scoped memory for tpu_custom_call.1']
    %11 = vsyncpa [#allocation3], 0
    // Predicated region
    $region2: #{tpu_custom_call.1} parent=1 // pred_check
      _
    $region3: #{tpu_custom_call.1} parent=1 // pred_check_branch
      %13 = sbr.rel (0) target = $region5
    $region4: #{tpu_custom_call.1} parent=1 // pred_region
      _
    $region5: #{tpu_custom_call.1} parent=1 // pred_fallthru
      _
    // Predicated region
    $region6: #{tpu_custom_call.1} parent=1 // pred_check
      _
    $region7: #{tpu_custom_call.1} parent=1 // pred_check_branch
      %15 = sbr.rel (0) target = $region9
    $region8: #{tpu_custom_call.1} parent=1 // pred_region
      _
    $region9: #{tpu_custom_call.1} parent=1 // pred_fallthru
      _
    // Predicated region
    $region10: #{tpu_custom_call.1} parent=1 // pred_check
      _
    $region11: #{tpu_custom_call.1} parent=1 // pred_check_branch
      %17 = sbr.rel (0) target = $region13
    $region12: #{tpu_custom_call.1} parent=1 // pred_region
      _
    $region13: #{tpu_custom_call.1} parent=1 // pred_fallthru
      _
    // Predicated region
    $region14: #{tpu_custom_call.1} parent=1 // pred_check
      _
    $region15: #{tpu_custom_call.1} parent=1 // pred_check_branch
      %19 = sbr.rel (0) target = $region17
    $region16: #{tpu_custom_call.1} parent=1 // pred_region
      _
    $region17: #{tpu_custom_call.1} parent=1 // pred_fallthru
      _
    // Predicated region
    $region18: #{tpu_custom_call.1} parent=1 // pred_check
      _
    $region19: #{tpu_custom_call.1} parent=1 // pred_check_branch
      %21 = sbr.rel (0) target = $region21
    $region20: #{tpu_custom_call.1} parent=1 // pred_region
      _
    $region21: #{tpu_custom_call.1} parent=1 // pred_fallthru
      _
    // Predicated region
    $region22: #{tpu_custom_call.1} parent=1 // pred_check
      _
    $region23: #{tpu_custom_call.1} parent=1 // pred_check_branch
      %23 = sbr.rel (0) target = $region25
    $region24: #{tpu_custom_call.1} parent=1 // pred_region
      _
    $region25: #{tpu_custom_call.1} parent=1 // pred_fallthru
      _
    %v24 = vld [vmem:[%s0] sm:$0xff]
    %v25 = vld [vmem:[%s0 + $0x8] sm:$0xff]
    %v26 = vld [vmem:[%s0 + $0x10] sm:$0xff]
    %v27 = vld [vmem:[%s0 + $0x18] sm:$0xff]
    %v28 = vld [vmem:[%s0 + $0x20] sm:$0xff]
    %v29 = vld [vmem:[%s0 + $0x28] sm:$0xff]
    %v30 = vld [vmem:[%s0 + $0x30] sm:$0xff]
    %v31 = vld [vmem:[%s0 + $0x38] sm:$0xff]
    %v32 = vld [vmem:[%s0 + $0x40] sm:$0xff]
    %v33 = vld [vmem:[%s0 + $0x48] sm:$0xff]
    %v34 = vld [vmem:[%s0 + $0x50] sm:$0xff]
    %v35 = vld [vmem:[%s0 + $0x58] sm:$0xff]
    %v36 = vld [vmem:[%s0 + $0x60] sm:$0xff]
    %v37 = vld [vmem:[%s0 + $0x68] sm:$0xff]
    %v38 = vld [vmem:[%s0 + $0x70] sm:$0xff]
    %v39 = vld [vmem:[%s0 + $0x78] sm:$0xff]
    %v40 = vld [vmem:[%s1] sm:$0xff]
    %v41 = vld [vmem:[%s1 + $0x8] sm:$0xff]
    %v42 = vld [vmem:[%s1 + $0x10] sm:$0xff]
    %v43 = vld [vmem:[%s1 + $0x18] sm:$0xff]
    %v44 = vld [vmem:[%s1 + $0x20] sm:$0xff]
    %v45 = vld [vmem:[%s1 + $0x28] sm:$0xff]
    %v46 = vld [vmem:[%s1 + $0x30] sm:$0xff]
    %v47 = vld [vmem:[%s1 + $0x38] sm:$0xff]
    %v48 = vld [vmem:[%s1 + $0x40] sm:$0xff]
    %v49 = vld [vmem:[%s1 + $0x48] sm:$0xff]
    %v50 = vld [vmem:[%s1 + $0x50] sm:$0xff]
    %v51 = vld [vmem:[%s1 + $0x58] sm:$0xff]
    %v52 = vld [vmem:[%s1 + $0x60] sm:$0xff]
    %v53 = vld [vmem:[%s1 + $0x68] sm:$0xff]
    %v54 = vld [vmem:[%s1 + $0x70] sm:$0xff]
    %v55 = vld [vmem:[%s1 + $0x78] sm:$0xff]
    %v56 = vld [vmem:[%s1 + $0x80] sm:$0xff]
    %v57 = vld [vmem:[%s1 + $0x88] sm:$0xff]
    %v58 = vld [vmem:[%s1 + $0x90] sm:$0xff]
    %v59 = vld [vmem:[%s1 + $0x98] sm:$0xff]
    %v60 = vld [vmem:[%s1 + $0xa0] sm:$0xff]
    %v61 = vld [vmem:[%s1 + $0xa8] sm:$0xff]
    %v62 = vld [vmem:[%s1 + $0xb0] sm:$0xff]
    %v63 = vld [vmem:[%s1 + $0xb8] sm:$0xff]
    %v64 = vld [vmem:[%s1 + $0xc0] sm:$0xff]
    %v65 = vld [vmem:[%s1 + $0xc8] sm:$0xff]
    %v66 = vld [vmem:[%s1 + $0xd0] sm:$0xff]
    %v67 = vld [vmem:[%s1 + $0xd8] sm:$0xff]
    %v68 = vld [vmem:[%s1 + $0xe0] sm:$0xff]
    %v69 = vld [vmem:[%s1 + $0xe8] sm:$0xff]
    %v70 = vld [vmem:[%s1 + $0xf0] sm:$0xff]
    %v71 = vld [vmem:[%s1 + $0xf8] sm:$0xff]
    %72 = vmatpush.msra.mxu0 %v55
    %73 = vmatpush.msra.mxu0 %v54
    %74 = vmatpush.msra.mxu0 %v53
    %75 = vmatpush.msra.mxu0 %v52
    %76 = vmatpush.msra.mxu0 %v51
    %77 = vmatpush.msra.mxu0 %v50
    %78 = vmatpush.msra.mxu0 %v49
    %79 = vmatpush.msra.mxu0 %v48
    %80 = vmatpush.msra.mxu0 %v47
    %81 = vmatpush.msra.mxu0 %v46
    %82 = vmatpush.msra.mxu0 %v45
    %83 = vmatpush.msra.mxu0 %v44
    %84 = vmatpush.msra.mxu0 %v43
    %85 = vmatpush.msra.mxu0 %v42
    %86 = vmatpush.msra.mxu0 %v41
    %87 = vmatpush.msra.mxu0 %v40
    %88 = vmatmul.f32.gmra.mxu0 %v24
    %v89 = vpop.f32.mrf.mxu0
    %v90 = vadd.f32 0.0, %v89
    %91 = vmatmul.f32.gmra.mxu0 %v26
    %v92 = vpop.f32.mrf.mxu0
    %v93 = vadd.f32 0.0, %v92
    %94 = vmatmul.f32.gmra.mxu0 %v28
    %v95 = vpop.f32.mrf.mxu0
    %v96 = vadd.f32 0.0, %v95
    %97 = vmatmul.f32.gmra.mxu0 %v30
    %v98 = vpop.f32.mrf.mxu0
    %v99 = vadd.f32 0.0, %v98
    %100 = vmatmul.f32.gmra.mxu0 %v32
    %v101 = vpop.f32.mrf.mxu0
    %v102 = vadd.f32 0.0, %v101
    %103 = vmatmul.f32.gmra.mxu0 %v34
    %v104 = vpop.f32.mrf.mxu0
    %v105 = vadd.f32 0.0, %v104
    %106 = vmatmul.f32.gmra.mxu0 %v36
    %v107 = vpop.f32.mrf.mxu0
    %v108 = vadd.f32 0.0, %v107
    %109 = vmatmul.f32.gmra.mxu0 %v38
    %v110 = vpop.f32.mrf.mxu0
    %v111 = vadd.f32 0.0, %v110
    %112 = vdwg.mxu0
    %113 = vmatpush.msra.mxu0 %v71
    %114 = vmatpush.msra.mxu0 %v70
    %115 = vmatpush.msra.mxu0 %v69
    %116 = vmatpush.msra.mxu0 %v68
    %117 = vmatpush.msra.mxu0 %v67
    %118 = vmatpush.msra.mxu0 %v66
    %119 = vmatpush.msra.mxu0 %v65
    %120 = vmatpush.msra.mxu0 %v64
    %121 = vmatpush.msra.mxu0 %v63
    %122 = vmatpush.msra.mxu0 %v62
    %123 = vmatpush.msra.mxu0 %v61
    %124 = vmatpush.msra.mxu0 %v60
    %125 = vmatpush.msra.mxu0 %v59
    %126 = vmatpush.msra.mxu0 %v58
    %127 = vmatpush.msra.mxu0 %v57
    %128 = vmatpush.msra.mxu0 %v56
    %129 = vmatmul.f32.gmra.mxu0 %v25
    %v130 = vpop.f32.mrf.mxu0
    %v131 = vadd.f32 %v90, %v130
    %132 = vmatmul.f32.gmra.mxu0 %v27
    %v133 = vpop.f32.mrf.mxu0
    %v134 = vadd.f32 %v93, %v133
    %135 = vmatmul.f32.gmra.mxu0 %v29
    %v136 = vpop.f32.mrf.mxu0
    %v137 = vadd.f32 %v96, %v136
    %138 = vmatmul.f32.gmra.mxu0 %v31
    %v139 = vpop.f32.mrf.mxu0
    %v140 = vadd.f32 %v99, %v139
    %141 = vmatmul.f32.gmra.mxu0 %v33
    %v142 = vpop.f32.mrf.mxu0
    %v143 = vadd.f32 %v102, %v142
    %144 = vmatmul.f32.gmra.mxu0 %v35
    %v145 = vpop.f32.mrf.mxu0
    %v146 = vadd.f32 %v105, %v145
    %147 = vmatmul.f32.gmra.mxu0 %v37
    %v148 = vpop.f32.mrf.mxu0
    %v149 = vadd.f32 %v108, %v148
    %150 = vmatmul.f32.gmra.mxu0 %v39
    %v151 = vpop.f32.mrf.mxu0
    %v152 = vadd.f32 %v111, %v151
    %153 = vdwg.mxu0
    %v154 = vmul.f32 %v131, 0.015625
    %v155 = vmul.f32 %v134, 0.015625
    %v156 = vmul.f32 %v137, 0.015625
    %v157 = vmul.f32 %v140, 0.015625
    %v158 = vmul.f32 %v143, 0.015625
    %v159 = vmul.f32 %v146, 0.015625
    %v160 = vmul.f32 %v149, 0.015625
    %v161 = vmul.f32 %v152, 0.015625
    %170 = vset.pattern.permute.xlu0 0
    %171 = vperm.xlu0 %170, %v154
    %v172 = vpop.permute.xlu0 %171
    %173 = vset.pattern.permute.xlu0 0
    %174 = vperm.xlu0 %173, %v155
    %v175 = vpop.permute.xlu0 %174
    %176 = vset.pattern.permute.xlu0 0
    %177 = vperm.xlu0 %176, %v156
    %v178 = vpop.permute.xlu0 %177
    %179 = vset.pattern.permute.xlu0 0
    %180 = vperm.xlu0 %179, %v157
    %v181 = vpop.permute.xlu0 %180
    %182 = vset.pattern.permute.xlu0 0
    %183 = vperm.xlu0 %182, %v158
    %v184 = vpop.permute.xlu0 %183
    %185 = vset.pattern.permute.xlu0 0
    %186 = vperm.xlu0 %185, %v159
    %v187 = vpop.permute.xlu0 %186
    %188 = vset.pattern.permute.xlu0 0
    %189 = vperm.xlu0 %188, %v160
    %v190 = vpop.permute.xlu0 %189
    %191 = vset.pattern.permute.xlu0 0
    %192 = vperm.xlu0 %191, %v161
    %v193 = vpop.permute.xlu0 %192
    %v194 = vlaneseq
    %v195 = vand.u32 %v194, 127
    %v196 = vperm.slane %v172, %v195
    %v197 = vadd.s32 %v195, 4294967288
    %v198 = vperm.slane %v175, %v197
    %vm199 = vcmask 130112
    %v200 = vsel %vm199, %v198, %v196
    %v201 = vadd.s32 %v195, 4294967280
    %v202 = vperm.slane %v178, %v201
    %vm203 = vcmask 195712
    %v204 = vsel %vm203, %v202, %v200
    %v205 = vadd.s32 %v195, 4294967272
    %v206 = vperm.slane %v181, %v205
    %vm207 = vcmask 261312
    %v208 = vsel %vm207, %v206, %v204
    %v209 = vperm.slane %v184, %v195
    %v210 = vperm.slane %v187, %v197
    %v211 = vsel %vm199, %v210, %v209
    %v212 = vperm.slane %v190, %v201
    %v213 = vsel %vm203, %v212, %v211
    %v214 = vperm.slane %v193, %v205
    %v215 = vsel %vm207, %v214, %v213
    %vm216 = vcmask 1041409
    %v217 = vsel %vm216, %v215, %v208
    %219 = vset.pattern.permute.xlu0 1
    %220 = vperm.xlu0 %219, %v154
    %v221 = vpop.permute.xlu0 %220
    %222 = vset.pattern.permute.xlu0 1
    %223 = vperm.xlu0 %222, %v155
    %v224 = vpop.permute.xlu0 %223
    %225 = vset.pattern.permute.xlu0 1
    %226 = vperm.xlu0 %225, %v156
    %v227 = vpop.permute.xlu0 %226
    %228 = vset.pattern.permute.xlu0 1
    %229 = vperm.xlu0 %228, %v157
    %v230 = vpop.permute.xlu0 %229
    %231 = vset.pattern.permute.xlu0 1
    %232 = vperm.xlu0 %231, %v158
    %v233 = vpop.permute.xlu0 %232
    %234 = vset.pattern.permute.xlu0 1
    %235 = vperm.xlu0 %234, %v159
    %v236 = vpop.permute.xlu0 %235
    %237 = vset.pattern.permute.xlu0 1
    %238 = vperm.xlu0 %237, %v160
    %v239 = vpop.permute.xlu0 %238
    %240 = vset.pattern.permute.xlu0 1
    %241 = vperm.xlu0 %240, %v161
    %v242 = vpop.permute.xlu0 %241
    %v243 = vadd.s32 %v195, 4294967264
    %v244 = vperm.slane %v221, %v243
    %v245 = vadd.s32 %v195, 4294967256
    %v246 = vperm.slane %v224, %v245
    %vm247 = vcmask 392512
    %v248 = vsel %vm247, %v246, %v244
    %v249 = vadd.s32 %v195, 4294967248
    %v250 = vperm.slane %v227, %v249
    %vm251 = vcmask 458112
    %v252 = vsel %vm251, %v250, %v248
    %v253 = vadd.s32 %v195, 4294967240
    %v254 = vperm.slane %v230, %v253
    %vm255 = vcmask 523712
    %v256 = vsel %vm255, %v254, %v252
    %v257 = vperm.slane %v233, %v243
    %v258 = vperm.slane %v236, %v245
    %v259 = vsel %vm247, %v258, %v257
    %v260 = vperm.slane %v239, %v249
    %v261 = vsel %vm251, %v260, %v259
    %v262 = vperm.slane %v242, %v253
    %v263 = vsel %vm255, %v262, %v261
    %v264 = vsel %vm216, %v263, %v256
    %266 = vset.pattern.permute.xlu0 2
    %267 = vperm.xlu0 %266, %v154
    %v268 = vpop.permute.xlu0 %267
    %269 = vset.pattern.permute.xlu0 2
    %270 = vperm.xlu0 %269, %v155
    %v271 = vpop.permute.xlu0 %270
    %272 = vset.pattern.permute.xlu0 2
    %273 = vperm.xlu0 %272, %v156
    %v274 = vpop.permute.xlu0 %273
    %275 = vset.pattern.permute.xlu0 2
    %276 = vperm.xlu0 %275, %v157
    %v277 = vpop.permute.xlu0 %276
    %278 = vset.pattern.permute.xlu0 2
    %279 = vperm.xlu0 %278, %v158
    %v280 = vpop.permute.xlu0 %279
    %281 = vset.pattern.permute.xlu0 2
    %282 = vperm.xlu0 %281, %v159
    %v283 = vpop.permute.xlu0 %282
    %284 = vset.pattern.permute.xlu0 2
    %285 = vperm.xlu0 %284, %v160
    %v286 = vpop.permute.xlu0 %285
    %287 = vset.pattern.permute.xlu0 2
    %288 = vperm.xlu0 %287, %v161
    %v289 = vpop.permute.xlu0 %288
    %v290 = vadd.s32 %v195, 4294967232
    %v291 = vperm.slane %v268, %v290
    %v292 = vadd.s32 %v195, 4294967224
    %v293 = vperm.slane %v271, %v292
    %vm294 = vcmask 654912
    %v295 = vsel %vm294, %v293, %v291
    %v296 = vadd.s32 %v195, 4294967216
    %v297 = vperm.slane %v274, %v296
    %vm298 = vcmask 720512
    %v299 = vsel %vm298, %v297, %v295
    %v300 = vadd.s32 %v195, 4294967208
    %v301 = vperm.slane %v277, %v300
    %vm302 = vcmask 786112
    %v303 = vsel %vm302, %v301, %v299
    %v304 = vperm.slane %v280, %v290
    %v305 = vperm.slane %v283, %v292
    %v306 = vsel %vm294, %v305, %v304
    %v307 = vperm.slane %v286, %v296
    %v308 = vsel %vm298, %v307, %v306
    %v309 = vperm.slane %v289, %v300
    %v310 = vsel %vm302, %v309, %v308
    %v311 = vsel %vm216, %v310, %v303
    %313 = vset.pattern.permute.xlu0 3
    %314 = vperm.xlu0 %313, %v154
    %v315 = vpop.permute.xlu0 %314
    %316 = vset.pattern.permute.xlu0 3
    %317 = vperm.xlu0 %316, %v155
    %v318 = vpop.permute.xlu0 %317
    %319 = vset.pattern.permute.xlu0 3
    %320 = vperm.xlu0 %319, %v156
    %v321 = vpop.permute.xlu0 %320
    %322 = vset.pattern.permute.xlu0 3
    %323 = vperm.xlu0 %322, %v157
    %v324 = vpop.permute.xlu0 %323
    %325 = vset.pattern.permute.xlu0 3
    %326 = vperm.xlu0 %325, %v158
    %v327 = vpop.permute.xlu0 %326
    %328 = vset.pattern.permute.xlu0 3
    %329 = vperm.xlu0 %328, %v159
    %v330 = vpop.permute.xlu0 %329
    %331 = vset.pattern.permute.xlu0 3
    %332 = vperm.xlu0 %331, %v160
    %v333 = vpop.permute.xlu0 %332
    %334 = vset.pattern.permute.xlu0 3
    %335 = vperm.xlu0 %334, %v161
    %v336 = vpop.permute.xlu0 %335
    %v337 = vadd.s32 %v195, 4294967200
    %v338 = vperm.slane %v315, %v337
    %v339 = vadd.s32 %v195, 4294967192
    %v340 = vperm.slane %v318, %v339
    %vm341 = vcmask 917312
    %v342 = vsel %vm341, %v340, %v338
    %v343 = vadd.s32 %v195, 4294967184
    %v344 = vperm.slane %v321, %v343
    %vm345 = vcmask 982912
    %v346 = vsel %vm345, %v344, %v342
    %v347 = vadd.s32 %v195, 4294967176
    %v348 = vperm.slane %v324, %v347
    %vm349 = vcmask 1048512
    %v350 = vsel %vm349, %v348, %v346
    %v351 = vperm.slane %v327, %v337
    %v352 = vperm.slane %v330, %v339
    %v353 = vsel %vm341, %v352, %v351
    %v354 = vperm.slane %v333, %v343
    %v355 = vsel %vm345, %v354, %v353
    %v356 = vperm.slane %v336, %v347
    %v357 = vsel %vm349, %v356, %v355
    %v358 = vsel %vm216, %v357, %v350
    %vm360 = vcmask 261120
    %v361 = vsel %vm360, %v217, %v264
    %vm362 = vcmask 523264
    %v363 = vsel %vm362, %v361, %v311
    %vm364 = vcmask 785408
    %v365 = vsel %vm364, %v363, %v358
    %v366 = vld [vmem:[%s2] sm:$0x3]
    %vm367 = vcmp.gt.f32.partialorder %v366, 0.5
    %v368 = vsel %vm367, 1, 0
    %v369 = vperm.slane %v368, 0
    %v370 = vperm.slane %v368, 1
    %vm371 = vcmp.eq.s32.totalorder %v369, 1
    %vm372 = vcmp.eq.s32.totalorder %v370, 1
    %v373 = vsel %vm371, %v24, -3.4028235e+38
    %v374 = vsel %vm372, %v25, -3.4028235e+38
    %v375 = vsel %vm371, %v26, -3.4028235e+38
    %v376 = vsel %vm372, %v27, -3.4028235e+38
    %v377 = vsel %vm371, %v28, -3.4028235e+38
    %v378 = vsel %vm372, %v29, -3.4028235e+38
    %v379 = vsel %vm371, %v30, -3.4028235e+38
    %v380 = vsel %vm372, %v31, -3.4028235e+38
    %v381 = vsel %vm371, %v32, -3.4028235e+38
    %v382 = vsel %vm372, %v33, -3.4028235e+38
    %v383 = vsel %vm371, %v34, -3.4028235e+38
    %v384 = vsel %vm372, %v35, -3.4028235e+38
    %v385 = vsel %vm371, %v36, -3.4028235e+38
    %v386 = vsel %vm372, %v37, -3.4028235e+38
    %v387 = vsel %vm371, %v38, -3.4028235e+38
    %v388 = vsel %vm372, %v39, -3.4028235e+38
    %v389 = vsel %vm371, -3.4028235e+38, %v24
    %v390 = vsel %vm372, -3.4028235e+38, %v25
    %v391 = vsel %vm371, -3.4028235e+38, %v26
    %v392 = vsel %vm372, -3.4028235e+38, %v27
    %v393 = vsel %vm371, -3.4028235e+38, %v28
    %v394 = vsel %vm372, -3.4028235e+38, %v29
    %v395 = vsel %vm371, -3.4028235e+38, %v30
    %v396 = vsel %vm372, -3.4028235e+38, %v31
    %v397 = vsel %vm371, -3.4028235e+38, %v32
    %v398 = vsel %vm372, -3.4028235e+38, %v33
    %v399 = vsel %vm371, -3.4028235e+38, %v34
    %v400 = vsel %vm372, -3.4028235e+38, %v35
    %v401 = vsel %vm371, -3.4028235e+38, %v36
    %v402 = vsel %vm372, -3.4028235e+38, %v37
    %v403 = vsel %vm371, -3.4028235e+38, %v38
    %v404 = vsel %vm372, -3.4028235e+38, %v39
    %405 = vmax.xlane.f32.xlu0 %v373
    %v406 = vpop.xlane.xlu0 %405
    %407 = vmax.xlane.f32.xlu0 %v375
    %v408 = vpop.xlane.xlu0 %407
    %409 = vmax.xlane.f32.xlu0 %v377
    %v410 = vpop.xlane.xlu0 %409
    %411 = vmax.xlane.f32.xlu0 %v379
    %v412 = vpop.xlane.xlu0 %411
    %413 = vmax.xlane.f32.xlu0 %v381
    %v414 = vpop.xlane.xlu0 %413
    %415 = vmax.xlane.f32.xlu0 %v383
    %v416 = vpop.xlane.xlu0 %415
    %417 = vmax.xlane.f32.xlu0 %v385
    %v418 = vpop.xlane.xlu0 %417
    %419 = vmax.xlane.f32.xlu0 %v387
    %v420 = vpop.xlane.xlu0 %419
    %421 = vmax.xlane.f32.xlu0 %v389
    %v422 = vpop.xlane.xlu0 %421
    %423 = vmax.xlane.f32.xlu0 %v391
    %v424 = vpop.xlane.xlu0 %423
    %425 = vmax.xlane.f32.xlu0 %v393
    %v426 = vpop.xlane.xlu0 %425
    %427 = vmax.xlane.f32.xlu0 %v395
    %v428 = vpop.xlane.xlu0 %427
    %429 = vmax.xlane.f32.xlu0 %v397
    %v430 = vpop.xlane.xlu0 %429
    %431 = vmax.xlane.f32.xlu0 %v399
    %v432 = vpop.xlane.xlu0 %431
    %433 = vmax.xlane.f32.xlu0 %v401
    %v434 = vpop.xlane.xlu0 %433
    %435 = vmax.xlane.f32.xlu0 %v403
    %v436 = vpop.xlane.xlu0 %435
    %437 = vmax.xlane.f32.xlu0 %v374
    %v438 = vpop.xlane.xlu0 %437
    %439 = vmax.xlane.f32.xlu0 %v376
    %v440 = vpop.xlane.xlu0 %439
    %441 = vmax.xlane.f32.xlu0 %v378
    %v442 = vpop.xlane.xlu0 %441
    %443 = vmax.xlane.f32.xlu0 %v380
    %v444 = vpop.xlane.xlu0 %443
    %445 = vmax.xlane.f32.xlu0 %v382
    %v446 = vpop.xlane.xlu0 %445
    %447 = vmax.xlane.f32.xlu0 %v384
    %v448 = vpop.xlane.xlu0 %447
    %449 = vmax.xlane.f32.xlu0 %v386
    %v450 = vpop.xlane.xlu0 %449
    %451 = vmax.xlane.f32.xlu0 %v388
    %v452 = vpop.xlane.xlu0 %451
    %453 = vmax.xlane.f32.xlu0 %v390
    %v454 = vpop.xlane.xlu0 %453
    %455 = vmax.xlane.f32.xlu0 %v392
    %v456 = vpop.xlane.xlu0 %455
    %457 = vmax.xlane.f32.xlu0 %v394
    %v458 = vpop.xlane.xlu0 %457
    %459 = vmax.xlane.f32.xlu0 %v396
    %v460 = vpop.xlane.xlu0 %459
    %461 = vmax.xlane.f32.xlu0 %v398
    %v462 = vpop.xlane.xlu0 %461
    %463 = vmax.xlane.f32.xlu0 %v400
    %v464 = vpop.xlane.xlu0 %463
    %465 = vmax.xlane.f32.xlu0 %v402
    %v466 = vpop.xlane.xlu0 %465
    %467 = vmax.xlane.f32.xlu0 %v404
    %v468 = vpop.xlane.xlu0 %467
    %v469 = vmax.f32 %v406, %v422
    %v470 = vmax.f32 %v408, %v424
    %v471 = vmax.f32 %v410, %v426
    %v472 = vmax.f32 %v412, %v428
    %v473 = vmax.f32 %v414, %v430
    %v474 = vmax.f32 %v416, %v432
    %v475 = vmax.f32 %v418, %v434
    %v476 = vmax.f32 %v420, %v436
    %v477 = vmax.f32 %v438, %v454
    %v478 = vmax.f32 %v440, %v456
    %v479 = vmax.f32 %v442, %v458
    %v480 = vmax.f32 %v444, %v460
    %v481 = vmax.f32 %v446, %v462
    %v482 = vmax.f32 %v448, %v464
    %v483 = vmax.f32 %v450, %v466
    %v484 = vmax.f32 %v452, %v468
    %v485 = vmax.f32 %v469, %v477
    %v486 = vmax.f32 %v470, %v478
    %v487 = vmax.f32 %v471, %v479
    %v488 = vmax.f32 %v472, %v480
    %v489 = vmax.f32 %v473, %v481
    %v490 = vmax.f32 %v474, %v482
    %v491 = vmax.f32 %v475, %v483
    %v492 = vmax.f32 %v476, %v484
    %v501 = vperm.slane %v406, %v195
    %v502 = vperm.slane %v408, %v197
    %v503 = vsel %vm199, %v502, %v501
    %v504 = vperm.slane %v410, %v201
    %v505 = vsel %vm203, %v504, %v503
    %v506 = vperm.slane %v412, %v205
    %v507 = vsel %vm207, %v506, %v505
    %v508 = vperm.slane %v414, %v195
    %v509 = vperm.slane %v416, %v197
    %v510 = vsel %vm199, %v509, %v508
    %v511 = vperm.slane %v418, %v201
    %v512 = vsel %vm203, %v511, %v510
    %v513 = vperm.slane %v420, %v205
    %v514 = vsel %vm207, %v513, %v512
    %v515 = vsel %vm216, %v514, %v507
    %v525 = vperm.slane %v422, %v243
    %v526 = vperm.slane %v424, %v245
    %v527 = vsel %vm247, %v526, %v525
    %v528 = vperm.slane %v426, %v249
    %v529 = vsel %vm251, %v528, %v527
    %v530 = vperm.slane %v428, %v253
    %v531 = vsel %vm255, %v530, %v529
    %v532 = vperm.slane %v430, %v243
    %v533 = vperm.slane %v432, %v245
    %v534 = vsel %vm247, %v533, %v532
    %v535 = vperm.slane %v434, %v249
    %v536 = vsel %vm251, %v535, %v534
    %v537 = vperm.slane %v436, %v253
    %v538 = vsel %vm255, %v537, %v536
    %v539 = vsel %vm216, %v538, %v531
    %v549 = vperm.slane %v438, %v290
    %v550 = vperm.slane %v440, %v292
    %v551 = vsel %vm294, %v550, %v549
    %v552 = vperm.slane %v442, %v296
    %v553 = vsel %vm298, %v552, %v551
    %v554 = vperm.slane %v444, %v300
    %v555 = vsel %vm302, %v554, %v553
    %v556 = vperm.slane %v446, %v290
    %v557 = vperm.slane %v448, %v292
    %v558 = vsel %vm294, %v557, %v556
    %v559 = vperm.slane %v450, %v296
    %v560 = vsel %vm298, %v559, %v558
    %v561 = vperm.slane %v452, %v300
    %v562 = vsel %vm302, %v561, %v560
    %v563 = vsel %vm216, %v562, %v555
    %v573 = vperm.slane %v454, %v337
    %v574 = vperm.slane %v456, %v339
    %v575 = vsel %vm341, %v574, %v573
    %v576 = vperm.slane %v458, %v343
    %v577 = vsel %vm345, %v576, %v575
    %v578 = vperm.slane %v460, %v347
    %v579 = vsel %vm349, %v578, %v577
    %v580 = vperm.slane %v462, %v337
    %v581 = vperm.slane %v464, %v339
    %v582 = vsel %vm341, %v581, %v580
    %v583 = vperm.slane %v466, %v343
    %v584 = vsel %vm345, %v583, %v582
    %v585 = vperm.slane %v468, %v347
    %v586 = vsel %vm349, %v585, %v584
    %v587 = vsel %vm216, %v586, %v579
    %v597 = vperm.slane %v485, %v195
    %v598 = vperm.slane %v486, %v197
    %v599 = vsel %vm199, %v598, %v597
    %v600 = vperm.slane %v487, %v201
    %v601 = vsel %vm203, %v600, %v599
    %v602 = vperm.slane %v488, %v205
    %v603 = vsel %vm207, %v602, %v601
    %v604 = vperm.slane %v489, %v195
    %v605 = vperm.slane %v490, %v197
    %v606 = vsel %vm199, %v605, %v604
    %v607 = vperm.slane %v491, %v201
    %v608 = vsel %vm203, %v607, %v606
    %v609 = vperm.slane %v492, %v205
    %v610 = vsel %vm207, %v609, %v608
    %v611 = vsel %vm216, %v610, %v603
    %v612 = vsel %vm360, %v515, %v539
    %v613 = vsel %vm362, %v612, %v563
    %v614 = vsel %vm364, %v613, %v587
    %v615 = vld [vmem:[%s3] sm:$0xff]
    %v616 = vld [vmem:[%s3 + $0x8] sm:$0xff]
    %v617 = vld [vmem:[%s3 + $0x10] sm:$0xff]
    %v618 = vld [vmem:[%s3 + $0x18] sm:$0xff]
    %v619 = vld [vmem:[%s3 + $0x20] sm:$0xff]
    %v620 = vld [vmem:[%s3 + $0x28] sm:$0xff]
    %v621 = vld [vmem:[%s3 + $0x30] sm:$0xff]
    %v622 = vld [vmem:[%s3 + $0x38] sm:$0xff]
    %v623 = vld [vmem:[%s3 + $0x40] sm:$0xff]
    %v624 = vld [vmem:[%s3 + $0x48] sm:$0xff]
    %v625 = vld [vmem:[%s3 + $0x50] sm:$0xff]
    %v626 = vld [vmem:[%s3 + $0x58] sm:$0xff]
    %v627 = vld [vmem:[%s3 + $0x60] sm:$0xff]
    %v628 = vld [vmem:[%s3 + $0x68] sm:$0xff]
    %v629 = vld [vmem:[%s3 + $0x70] sm:$0xff]
    %v630 = vld [vmem:[%s3 + $0x78] sm:$0xff]
    %v631 = vld [vmem:[%s4] sm:$0xff]
    %v632 = vld [vmem:[%s4 + $0x8] sm:$0xff]
    %v633 = vld [vmem:[%s4 + $0x10] sm:$0xff]
    %v634 = vld [vmem:[%s4 + $0x18] sm:$0xff]
    %v635 = vld [vmem:[%s4 + $0x20] sm:$0xff]
    %v636 = vld [vmem:[%s4 + $0x28] sm:$0xff]
    %v637 = vld [vmem:[%s4 + $0x30] sm:$0xff]
    %v638 = vld [vmem:[%s4 + $0x38] sm:$0xff]
    %v639 = vld [vmem:[%s4 + $0x40] sm:$0xff]
    %v640 = vld [vmem:[%s4 + $0x48] sm:$0xff]
    %v641 = vld [vmem:[%s4 + $0x50] sm:$0xff]
    %v642 = vld [vmem:[%s4 + $0x58] sm:$0xff]
    %v643 = vld [vmem:[%s4 + $0x60] sm:$0xff]
    %v644 = vld [vmem:[%s4 + $0x68] sm:$0xff]
    %v645 = vld [vmem:[%s4 + $0x70] sm:$0xff]
    %v646 = vld [vmem:[%s4 + $0x78] sm:$0xff]
    %v647 = vld [vmem:[%s4 + $0x80] sm:$0xff]
    %v648 = vld [vmem:[%s4 + $0x88] sm:$0xff]
    %v649 = vld [vmem:[%s4 + $0x90] sm:$0xff]
    %v650 = vld [vmem:[%s4 + $0x98] sm:$0xff]
    %v651 = vsel %vm360, %v611, 0
    %653 = vmatpush.msra.mxu0 %v646
    %654 = vmatpush.msra.mxu0 %v645
    %655 = vmatpush.msra.mxu0 %v644
    %656 = vmatpush.msra.mxu0 %v643
    %657 = vmatpush.msra.mxu0 %v642
    %658 = vmatpush.msra.mxu0 %v641
    %659 = vmatpush.msra.mxu0 %v640
    %660 = vmatpush.msra.mxu0 %v639
    %661 = vmatpush.msra.mxu0 %v638
    %662 = vmatpush.msra.mxu0 %v637
    %663 = vmatpush.msra.mxu0 %v636
    %664 = vmatpush.msra.mxu0 %v635
    %665 = vmatpush.msra.mxu0 %v634
    %666 = vmatpush.msra.mxu0 %v633
    %667 = vmatpush.msra.mxu0 %v632
    %668 = vmatpush.msra.mxu0 %v631
    %669 = vmatmul.f32.gmra.mxu0 %v614
    %v670 = vpop.f32.mrf.mxu0
    %v671 = vadd.f32 0.0, %v670
    %672 = vdwg.mxu0
    %673 = vmatpush.msra.mxu0 0.0
    %674 = vmatpush.msra.mxu0 0.0
    %675 = vmatpush.msra.mxu0 0.0
    %676 = vmatpush.msra.mxu0 0.0
    %677 = vmatpush.msra.mxu0 0.0
    %678 = vmatpush.msra.mxu0 0.0
    %679 = vmatpush.msra.mxu0 0.0
    %680 = vmatpush.msra.mxu0 0.0
    %681 = vmatpush.msra.mxu0 0.0
    %682 = vmatpush.msra.mxu0 0.0
    %683 = vmatpush.msra.mxu0 0.0
    %684 = vmatpush.msra.mxu0 0.0
    %685 = vmatpush.msra.mxu0 %v650
    %686 = vmatpush.msra.mxu0 %v649
    %687 = vmatpush.msra.mxu0 %v648
    %688 = vmatpush.msra.mxu0 %v647
    %689 = vmatmul.f32.gmra.mxu0 %v651
    %v690 = vpop.f32.mrf.mxu0
    %v691 = vadd.f32 %v671, %v690
    %692 = vdwg.mxu0
    %693 = vmatpush.msra.mxu0 %v630
    %694 = vmatpush.msra.mxu0 %v629
    %695 = vmatpush.msra.mxu0 %v628
    %696 = vmatpush.msra.mxu0 %v627
    %697 = vmatpush.msra.mxu0 %v626
    %698 = vmatpush.msra.mxu0 %v625
    %699 = vmatpush.msra.mxu0 %v624
    %700 = vmatpush.msra.mxu0 %v623
    %701 = vmatpush.msra.mxu0 %v622
    %702 = vmatpush.msra.mxu0 %v621
    %703 = vmatpush.msra.mxu0 %v620
    %704 = vmatpush.msra.mxu0 %v619
    %705 = vmatpush.msra.mxu0 %v618
    %706 = vmatpush.msra.mxu0 %v617
    %707 = vmatpush.msra.mxu0 %v616
    %708 = vmatpush.msra.mxu0 %v615
    %709 = vmatmul.f32.gmra.mxu0 %v365
    %v710 = vpop.f32.mrf.mxu0
    %v711 = vadd.f32 %v691, %v710
    %712 = vdwg.mxu0
    %v713 = vmax.f32 %v711, 0.0
    %v714 = vld [vmem:[%s5] sm:$0x3]
    %vm715 = vcmask 15360
    %v717 = vsel %vm715, %v713, 0
    %vm719 = vcmask 1041408
    %v721 = vsel %vm719, %v714, 0
    %723 = vmatpush.msra.mxu0 0.0
    %724 = vmatpush.msra.mxu0 0.0
    %725 = vmatpush.msra.mxu0 0.0
    %726 = vmatpush.msra.mxu0 0.0
    %727 = vmatpush.msra.mxu0 0.0
    %728 = vmatpush.msra.mxu0 0.0
    %729 = vmatpush.msra.mxu0 0.0
    %730 = vmatpush.msra.mxu0 0.0
    %731 = vmatpush.msra.mxu0 0.0
    %732 = vmatpush.msra.mxu0 0.0
    %733 = vmatpush.msra.mxu0 0.0
    %734 = vmatpush.msra.mxu0 0.0
    %735 = vmatpush.msra.mxu0 0.0
    %736 = vmatpush.msra.mxu0 0.0
    %737 = vmatpush.msra.mxu0 0.0
    %738 = vmatpush.msra.mxu0 %v721
    %739 = vmatmul.f32.gmra.mxu0 %v717
    %v740 = vpop.f32.mrf.mxu0
    %v741 = vadd.f32 0.0, %v740
    %742 = vdwg.mxu0
    %v743 = vsub.f32 0.0, %v741
    %v744 = vmul.f32 %v743, 1.442695
    %v745 = vpow.pop %v744
    %v746 = vadd.f32 %v745, 1.0
    %v747 = vrcp.pop %v746
    %v748 = vmul.f32 %v746, %v747
    %v749 = vsub.f32 1.0, %v748
    %v750 = vmul.f32 %v747, %v749
    %v751 = vadd.f32 %v747, %v750
    %vm752 = vweird.f32 %v746
    %vm753 = vweird.f32 %v747
    %vm754 = vmor %vm752, %vm753
    %v755 = vsel %vm754, %v747, %v751
    %v756 = vand.u32 2147483647, %v746
    %vm757 = vcmp.eq.f32.partialorder %v756, 8.507059e+37
    %v758 = vand.u32 %v746, 2147483648
    %v759 = vor.u32 1.1754944e-38, %v758
    %v760 = vsel %vm757, %v759, %v755
    %v761 = vmul.f32 1.0, %v760
    %v762 = vperm.slane %v761, 0
    %v763 = vlaneseq
    %v764 = vshrl.u32 %v763, 7
    %766 = vset.pattern.permute.xlu0 %v764
    %767 = vperm.xlu0 %766, %v762
    %v768 = vpop.permute.xlu0 %767
    %v769 = vlaneseq
    %v770 = vshrl.u32 %v769, 7
    %v771 = vadd.s32 %v770, 8
    %772 = vset.pattern.permute.xlu0 %v771
    %773 = vperm.xlu0 %772, %v762
    %v774 = vpop.permute.xlu0 %773
    %v775 = vlaneseq
    %v776 = vshrl.u32 %v775, 7
    %v777 = vadd.s32 %v776, 16
    %778 = vset.pattern.permute.xlu0 %v777
    %779 = vperm.xlu0 %778, %v762
    %v780 = vpop.permute.xlu0 %779
    %v781 = vlaneseq
    %v782 = vshrl.u32 %v781, 7
    %v783 = vadd.s32 %v782, 24
    %784 = vset.pattern.permute.xlu0 %v783
    %785 = vperm.xlu0 %784, %v762
    %v786 = vpop.permute.xlu0 %785
    %v787 = vperm.slane %v761, 1
    %v788 = vlaneseq
    %v789 = vshrl.u32 %v788, 7
    %791 = vset.pattern.permute.xlu0 %v789
    %792 = vperm.xlu0 %791, %v787
    %v793 = vpop.permute.xlu0 %792
    %v794 = vlaneseq
    %v795 = vshrl.u32 %v794, 7
    %v796 = vadd.s32 %v795, 8
    %797 = vset.pattern.permute.xlu0 %v796
    %798 = vperm.xlu0 %797, %v787
    %v799 = vpop.permute.xlu0 %798
    %v800 = vlaneseq
    %v801 = vshrl.u32 %v800, 7
    %v802 = vadd.s32 %v801, 16
    %803 = vset.pattern.permute.xlu0 %v802
    %804 = vperm.xlu0 %803, %v787
    %v805 = vpop.permute.xlu0 %804
    %v806 = vlaneseq
    %v807 = vshrl.u32 %v806, 7
    %v808 = vadd.s32 %v807, 24
    %809 = vset.pattern.permute.xlu0 %v808
    %810 = vperm.xlu0 %809, %v787
    %v811 = vpop.permute.xlu0 %810
    %v812 = vmul.f32 %v24, %v768
    %v813 = vmul.f32 %v25, %v768
    %v814 = vmul.f32 %v26, %v774
    %v815 = vmul.f32 %v27, %v774
    %v816 = vmul.f32 %v28, %v780
    %v817 = vmul.f32 %v29, %v780
    %v818 = vmul.f32 %v30, %v786
    %v819 = vmul.f32 %v31, %v786
    %v820 = vmul.f32 %v32, %v793
    %v821 = vmul.f32 %v33, %v793
    %v822 = vmul.f32 %v34, %v799
    %v823 = vmul.f32 %v35, %v799
    %v824 = vmul.f32 %v36, %v805
    %v825 = vmul.f32 %v37, %v805
    %v826 = vmul.f32 %v38, %v811
    %v827 = vmul.f32 %v39, %v811
    %828 = vst [vmem:[#allocation2] sm:$0xff] %v812
    %829 = vst [vmem:[#allocation2 + $0x8] sm:$0xff] %v813
    %830 = vst [vmem:[#allocation2 + $0x10] sm:$0xff] %v814
    %831 = vst [vmem:[#allocation2 + $0x18] sm:$0xff] %v815
    %832 = vst [vmem:[#allocation2 + $0x20] sm:$0xff] %v816
    %833 = vst [vmem:[#allocation2 + $0x28] sm:$0xff] %v817
    %834 = vst [vmem:[#allocation2 + $0x30] sm:$0xff] %v818
    %835 = vst [vmem:[#allocation2 + $0x38] sm:$0xff] %v819
    %836 = vst [vmem:[#allocation2 + $0x40] sm:$0xff] %v820
    %837 = vst [vmem:[#allocation2 + $0x48] sm:$0xff] %v821
    %838 = vst [vmem:[#allocation2 + $0x50] sm:$0xff] %v822
    %839 = vst [vmem:[#allocation2 + $0x58] sm:$0xff] %v823
    %840 = vst [vmem:[#allocation2 + $0x60] sm:$0xff] %v824
    %841 = vst [vmem:[#allocation2 + $0x68] sm:$0xff] %v825
    %842 = vst [vmem:[#allocation2 + $0x70] sm:$0xff] %v826
    %843 = vst [vmem:[#allocation2 + $0x78] sm:$0xff] %v827
    // Predicated region
    $region26: #{tpu_custom_call.1} parent=1 // pred_check
      _
    $region27: #{tpu_custom_call.1} parent=1 // pred_check_branch
      %845 = sbr.rel (0) target = $region29
    $region28: #{tpu_custom_call.1} parent=1 // pred_region
      %847 = vsyncadd [#allocation3], 0
      %s848 = sshll.u32 [#allocation2], 4
      %s849 = int_to_ptr.vmem [resolvable:$true] %s848
      %s850 = sshll.u32 %s6, 4
      %s851 = int_to_ptr.hbm [resolvable:$true] %s850
      %856 = dma.vmem_to_hbm [thread:$0]  %s849, 2048, %s851, [#allocation3], 256, 256, 16
    $region29: #{tpu_custom_call.1} parent=1 // pred_fallthru
      _
    // Predicated region
    $region30: #{tpu_custom_call.1} parent=1 // pred_check
      _
    $region31: #{tpu_custom_call.1} parent=1 // pred_check_branch
      %858 = sbr.rel (0) target = $region33
    $region32: #{tpu_custom_call.1} parent=1 // pred_region
      %860 = dma.done [#allocation3], 2048
    $region33: #{tpu_custom_call.1} parent=1 // pred_fallthru
      _
    %861 = vsyncpa [#allocation3], 1

</llo_original>
